<compile_context>
chip_gen: v6e
topology: v6e:2x2x1
jax: 0.10.0
libtpu: 0.0.40
codegen_flags: <defaults>
</compile_context>

<pallas_src>
import functools
from typing import NamedTuple

import jax
import jax.numpy as jnp
from jax.experimental import pallas as pl
from jax.experimental.pallas import tpu as pltpu


def _round_up(n, m):
    return ((n + m - 1) // m) * m


def _cdiv(a, b):
    return -(-a // b)


class PolicyParams(NamedTuple):
    w1: jax.Array        # (input_dim, hidden)   compute dtype
    b1: jax.Array        # (1, hidden)           f32
    wf: jax.Array        # (hidden, out_dim + 1) compute dtype (fused action+value head)
    bf: jax.Array        # (1, out_dim + 1)      f32
    out_dim: int
    use_sigmoid: bool


# ---------------------------------------------------------------------------
# Kernel
# ---------------------------------------------------------------------------
def policy_kernel(x_ref, w1_ref, b1_ref, wf_ref, bf_ref, probs_ref, value_ref,
                  *, out_dim, use_sigmoid):
    # hidden = relu(x @ W1 + b1)  -- one MXU matmul, f32 accumulation.
    x = x_ref[...].astype(w1_ref.dtype)
    h = jnp.dot(x, w1_ref[...], preferred_element_type=jnp.float32) + b1_ref[...]
    h = jnp.maximum(h, 0.0)

    # Fused head matmul: columns [0, out_dim) are the action head (logit
    # differences when use_sigmoid), column out_dim is the value head.
    fused = jnp.dot(h.astype(wf_ref.dtype), wf_ref[...],
                    preferred_element_type=jnp.float32) + bf_ref[...]

    # Value head -> narrow (tb, 1) output (full-extent last dim).
    value_ref[...] = fused[:, out_dim:out_dim + 1].astype(value_ref.dtype)

    logits = fused[:, :out_dim]
    if use_sigmoid:
        # out_dim == 2: softmax([l0, l1]) == [sigmoid(l0-l1), sigmoid(l1-l0)].
        # The fused weights already produced the logit differences, so this is
        # one EUP exp + elementwise VPU ops; no cross-lane reductions.
        z = jnp.exp(-jnp.abs(logits))
        r = 1.0 / (1.0 + z)
        probs = jnp.where(logits >= 0.0, r, z * r)
    else:
        # Generic numerically-stable softmax over the (narrow) real logits.
        # No padding lanes exist in `logits`, so no masking is needed.
        m = jnp.max(logits, axis=-1, keepdims=True)
        e = jnp.exp(logits - m)
        probs = e / jnp.sum(e, axis=-1, keepdims=True)

    probs_ref[...] = probs.astype(probs_ref.dtype)


# ---------------------------------------------------------------------------
# One-time parameter preparation (hoisted out of the per-step forward path)
# ---------------------------------------------------------------------------
def prepare_policy_params(w1, b1, wa, ba, wv, bv, *, use_sigmoid=None,
                          compute_dtype=jnp.float32):
    """Fuse the action + value heads into a single (hidden, out_dim+1) matmul.

    Call this ONCE (e.g. at init / after each optimizer update), not per step.
    compute_dtype=jnp.bfloat16 enables the bf16 MXU path on v6e/v7x (verify
    tolerance first); default f32.
    """
    hidden = w1.shape[1]
    out_dim = wa.shape[1]
    if use_sigmoid is None:
        # NOTE: the sigmoid trick fuses (wa[:,0]-wa[:,1]) before the matmul;
        # re-validate vs the reference if hidden / weight magnitudes grow.
        use_sigmoid = (out_dim == 2)

    wf = jnp.zeros((hidden, out_dim + 1), jnp.float32)
    bf = jnp.zeros((1, out_dim + 1), jnp.float32)
    if use_sigmoid:
        wf = wf.at[:, 0].set(wa[:, 0] - wa[:, 1])
        wf = wf.at[:, 1].set(wa[:, 1] - wa[:, 0])
        bf = bf.at[0, 0].set(ba[0] - ba[1])
        bf = bf.at[0, 1].set(ba[1] - ba[0])
    else:
        wf = wf.at[:, :out_dim].set(wa)
        bf = bf.at[0, :out_dim].set(ba)
    wf = wf.at[:, out_dim].set(wv[:, 0])
    bf = bf.at[0, out_dim].set(bv[0])

    return PolicyParams(
        w1=w1.astype(compute_dtype),
        b1=b1.reshape(1, -1).astype(jnp.float32),
        wf=wf.astype(compute_dtype),
        bf=bf.astype(jnp.float32),
        out_dim=int(out_dim),
        use_sigmoid=bool(use_sigmoid),
    )


# ---------------------------------------------------------------------------
# Forward wrapper
# ---------------------------------------------------------------------------
def _choose_batch_tiling(B, max_tile=512, split_threshold=256):
    """Pick (tb, b_pad, n_tiles): tiles <= max_tile rows, >=2 tiles when the
    batch is big enough to feed v7x's second TensorCore, minimal padding."""
    b_min = _round_up(max(B, 8), 8)
    n = _cdiv(b_min, max_tile)
    if n == 1 and b_min >= split_threshold:
        n = 2                      # give the 2nd TC work on v7x (no-op on v5e/v6e)
    tb = _round_up(_cdiv(b_min, n), 8)
    b_pad = tb * n
    return tb, b_pad, n


def _vmem_limit_bytes(tb, input_dim, hidden, out_dim, wbytes_per_elem):
    f32 = 4
    est = 2 * tb * input_dim * f32                                   # x (2 bufs)
    est += 2 * tb * (out_dim + 1) * f32                              # outputs (2 bufs)
    est += 2 * (input_dim * hidden + hidden * (out_dim + 1)) * wbytes_per_elem
    est += 2 * (hidden + out_dim + 1) * f32                          # biases
    est += 4 * tb * max(hidden, 128) * f32                           # intermediates / headroom
    est += 2 << 20
    # >=32 MiB is safe on every generation; cap at v7x's 64 MiB physical VMEM.
    return int(min(64 << 20, max(32 << 20, 2 * est)))


def policy_forward(x, params: PolicyParams):
    """Forward pass of Policy.

    x : (B, input_dim) f32
    params : PolicyParams from prepare_policy_params (call that once, not per step).
    Returns (action_prob (B, out_dim), value (B, 1)).
    """
    B, input_dim = x.shape
    hidden = params.w1.shape[1]
    out_dim = params.out_dim

    tb, b_pad, _ = _choose_batch_tiling(B)
    x_in = x if b_pad == B else jnp.zeros((b_pad, input_dim), x.dtype).at[:B].set(x)

    # Single-buffer the grid-constant weight blocks once they are big enough to
    # matter for VMEM (e.g. large hidden on v7x's 64 MiB); double-buffering a
    # constant-index block buys nothing.
    wbytes = params.w1.size * params.w1.dtype.itemsize + \
             params.wf.size * params.wf.dtype.itemsize
    resident_kw = {"pipeline_mode": pl.Buffered(1)} if wbytes > (4 << 20) else {}

    kernel = functools.partial(policy_kernel, out_dim=out_dim,
                               use_sigmoid=params.use_sigmoid)

    probs, value = pl.pallas_call(
        kernel,
        out_shape=(jax.ShapeDtypeStruct((b_pad, out_dim), jnp.float32),
                   jax.ShapeDtypeStruct((b_pad, 1), jnp.float32)),
        grid=(b_pad // tb,),
        in_specs=[
            pl.BlockSpec((tb, input_dim), lambda i: (i, 0)),                   # x tile
            pl.BlockSpec((input_dim, hidden), lambda i: (0, 0), **resident_kw),  # W1
            pl.BlockSpec((1, hidden), lambda i: (0, 0), **resident_kw),          # b1
            pl.BlockSpec((hidden, out_dim + 1), lambda i: (0, 0), **resident_kw),  # fused W
            pl.BlockSpec((1, out_dim + 1), lambda i: (0, 0), **resident_kw),       # fused b
        ],
        out_specs=(pl.BlockSpec((tb, out_dim), lambda i: (i, 0)),
                   pl.BlockSpec((tb, 1), lambda i: (i, 0))),
        compiler_params=pltpu.CompilerParams(
            dimension_semantics=("parallel",),
            vmem_limit_bytes=_vmem_limit_bytes(tb, input_dim, hidden, out_dim,
                                               params.w1.dtype.itemsize)),
    )(x_in, params.w1, params.b1, params.wf, params.bf)

    if b_pad != B:
        probs = probs[:B]
        value = value[:B]
    return probs, value


# ---------------------------------------------------------------------------
# Init + self-test
# ---------------------------------------------------------------------------
def init_policy_params(key, input_dim, hidden_size, output_dim):
    """Deterministic init mimicking nn.Linear's U(-1/sqrt(fan_in), 1/sqrt(fan_in))."""
    ks = jax.random.split(key, 6)

    def lin(kw, kb, fan_in, fan_out):
        bound = 1.0 / jnp.sqrt(jnp.float32(fan_in))
        # stored as (in, out) so the kernel computes x @ W
        w = jax.random.uniform(kw, (fan_in, fan_out), jnp.float32, -bound, bound)
        b = jax.random.uniform(kb, (fan_out,), jnp.float32, -bound, bound)
        return w, b

    w1, b1 = lin(ks[0], ks[1], input_dim, hidden_size)
    wa, ba = lin(ks[2], ks[3], hidden_size, output_dim)
    wv, bv = lin(ks[4], ks[5], hidden_size, 1)
    return w1, b1, wa, ba, wv, bv


def _reference(x, raw):
    w1, b1, wa, ba, wv, bv = raw
    h = jnp.maximum(x @ w1 + b1, 0.0)
    return jax.nn.softmax(h @ wa + ba, axis=-1), h @ wv + bv


if __name__ == "__main__":
    key = jax.random.PRNGKey(0)

    # --- CartPole-like shapes: input_dim=4 (state), output_dim=2, hidden=32 ---
    B, INPUT_DIM, HIDDEN, OUT_DIM = 8, 4, 32, 2
    kx, kp, kx2, kp2 = jax.random.split(key, 4)
    x = jax.random.normal(kx, (B, INPUT_DIM), jnp.float32)
    raw = init_policy_params(kp, INPUT_DIM, HIDDEN, OUT_DIM)

    prepared = prepare_policy_params(*raw)            # one-time prep (hoisted)
    probs, value = policy_forward(x, prepared)        # per-step forward
    jax.block_until_ready((probs, value))

    probs_ref, value_ref = _reference(x, raw)
    assert jnp.allclose(probs, probs_ref, atol=1e-5), "probs mismatch (sigmoid path)"
    assert jnp.allclose(value, value_ref, atol=1e-5), "value mismatch"
    assert jnp.allclose(jnp.sum(probs, axis=-1), 1.0, atol=1e-5), "softmax not normalized"

    # --- same params through the generic-softmax path ---
    prepared_gen = prepare_policy_params(*raw, use_sigmoid=False)
    probs_g, value_g = policy_forward(x, prepared_gen)
    jax.block_until_ready((probs_g, value_g))
    assert jnp.allclose(probs_g, probs_ref, atol=1e-5), "probs mismatch (generic path)"
    assert jnp.allclose(value_g, value_ref, atol=1e-5), "value mismatch (generic path)"

    # --- out_dim=3, non-multiple-of-8 batch: exercises padding + generic softmax ---
    B2, HIDDEN2, OUT_DIM2 = 5, 64, 3
    x2 = jax.random.normal(kx2, (B2, INPUT_DIM), jnp.float32)
    raw2 = init_policy_params(kp2, INPUT_DIM, HIDDEN2, OUT_DIM2)
    prepared2 = prepare_policy_params(*raw2)
    probs2, value2 = policy_forward(x2, prepared2)
    jax.block_until_ready((probs2, value2))
    probs2_ref, value2_ref = _reference(x2, raw2)
    assert jnp.allclose(probs2, probs2_ref, atol=1e-5), "probs mismatch (out_dim=3)"
    assert jnp.allclose(value2, value2_ref, atol=1e-5), "value mismatch (out_dim=3)"

    # TODO(synk): choose_action (Categorical sampling) and backprop_rf/backprop_ac
    # (returns normalization, losses, Adam update) are training-loop logic outside
    # the forward pass and are not kernelized.
    print("KERNEL_OK")
</pallas_src>

<mosaic_0001>
module attributes {stable_mosaic.version = 11 : i64} {
  func.func @policy_kernel(%arg0: i32, %arg1: memref<8x4xf32, #tpu.memory_space<vmem>>, %arg2: memref<4x32xf32, #tpu.memory_space<vmem>>, %arg3: memref<1x32xf32, #tpu.memory_space<vmem>>, %arg4: memref<32x3xf32, #tpu.memory_space<vmem>>, %arg5: memref<1x3xf32, #tpu.memory_space<vmem>>, %arg6: memref<8x2xf32, #tpu.memory_space<vmem>>, %arg7: memref<8x1xf32, #tpu.memory_space<vmem>>) attributes {dimension_semantics = [#tpu.dimension_semantics<parallel>], iteration_bounds = array<i64: 1>, scalar_prefetch = 0 : i64, scratch_operands = 0 : i64, tpu.core_type = #tpu.core_type<tc>, window_params = [{transform_indices = @transform_0, window_bounds = array<i64: 8, 4>}, {pipeline_mode = #tpu.pipeline_mode<synchronous>, transform_indices = @transform_1, window_bounds = array<i64: 4, 32>}, {pipeline_mode = #tpu.pipeline_mode<synchronous>, transform_indices = @transform_2, window_bounds = array<i64: 1, 32>}, {pipeline_mode = #tpu.pipeline_mode<synchronous>, transform_indices = @transform_3, window_bounds = array<i64: 32, 3>}, {pipeline_mode = #tpu.pipeline_mode<synchronous>, transform_indices = @transform_4, window_bounds = array<i64: 1, 3>}, {transform_indices = @transform_5, window_bounds = array<i64: 8, 2>}, {transform_indices = @transform_6, window_bounds = array<i64: 8, 1>}]} {
    %c0 = arith.constant 0 : index
    %c0_0 = arith.constant 0 : index
    %0 = vector.load %arg1[%c0, %c0_0] : memref<8x4xf32, #tpu.memory_space<vmem>>, vector<8x4xf32>
    %c0_1 = arith.constant 0 : index
    %c0_2 = arith.constant 0 : index
    %1 = vector.load %arg2[%c0_1, %c0_2] : memref<4x32xf32, #tpu.memory_space<vmem>>, vector<4x32xf32>
    %cst = arith.constant dense<0.000000e+00> : vector<8x32xf32>
    %2 = tpu.matmul %0, %1, %cst {dimension_numbers = #tpu.dot_dimension_numbers<[1], [0], [0], [1], [0, 0, 1, 1], [], []>} : vector<8x4xf32>, vector<4x32xf32>, vector<8x32xf32> -> vector<8x32xf32>
    %c0_3 = arith.constant 0 : index
    %c0_4 = arith.constant 0 : index
    %3 = vector.load %arg3[%c0_3, %c0_4] : memref<1x32xf32, #tpu.memory_space<vmem>>, vector<1x32xf32>
    %4 = vector.broadcast %3 : vector<1x32xf32> to vector<8x32xf32>
    %5 = arith.addf %2, %4 : vector<8x32xf32>
    %cst_5 = arith.constant 0.000000e+00 : f32
    %6 = vector.broadcast %cst_5 : f32 to vector<8x32xf32>
    %7 = arith.maximumf %5, %6 : vector<8x32xf32>
    %c0_6 = arith.constant 0 : index
    %c0_7 = arith.constant 0 : index
    %8 = vector.load %arg4[%c0_6, %c0_7] : memref<32x3xf32, #tpu.memory_space<vmem>>, vector<32x3xf32>
    %cst_8 = arith.constant dense<0.000000e+00> : vector<8x3xf32>
    %9 = tpu.matmul %7, %8, %cst_8 {dimension_numbers = #tpu.dot_dimension_numbers<[1], [0], [0], [1], [0, 0, 1, 1], [], []>} : vector<8x32xf32>, vector<32x3xf32>, vector<8x3xf32> -> vector<8x3xf32>
    %c0_9 = arith.constant 0 : index
    %c0_10 = arith.constant 0 : index
    %10 = vector.load %arg5[%c0_9, %c0_10] : memref<1x3xf32, #tpu.memory_space<vmem>>, vector<1x3xf32>
    %11 = vector.broadcast %10 : vector<1x3xf32> to vector<8x3xf32>
    %12 = arith.addf %9, %11 : vector<8x3xf32>
    %13 = vector.extract_strided_slice %12 {offsets = [0, 2], sizes = [8, 1], strides = [1, 1]} : vector<8x3xf32> to vector<8x1xf32>
    %c0_11 = arith.constant 0 : index
    %c0_12 = arith.constant 0 : index
    %14 = vector.load %arg7[%c0_11, %c0_12] : memref<8x1xf32, #tpu.memory_space<vmem>>, vector<8x1xf32>
    tpu.vector_store %arg7[%c0_11, %c0_12], %13 {strides = array<i32>} : memref<8x1xf32, #tpu.memory_space<vmem>>, vector<8x1xf32>,
    %15 = vector.extract_strided_slice %12 {offsets = [0, 0], sizes = [8, 2], strides = [1, 1]} : vector<8x3xf32> to vector<8x2xf32>
    %16 = math.absf %15 : vector<8x2xf32>
    %cst_13 = arith.constant 0.000000e+00 : f32
    %17 = vector.broadcast %cst_13 : f32 to vector<8x2xf32>
    %18 = arith.subf %17, %16 : vector<8x2xf32>
    %19 = math.exp %18 : vector<8x2xf32>
    %cst_14 = arith.constant 1.000000e+00 : f32
    %20 = vector.broadcast %cst_14 : f32 to vector<8x2xf32>
    %21 = arith.addf %20, %19 : vector<8x2xf32>
    %cst_15 = arith.constant 1.000000e+00 : f32
    %22 = vector.broadcast %cst_15 : f32 to vector<8x2xf32>
    %23 = arith.divf %22, %21 : vector<8x2xf32>
    %cst_16 = arith.constant 0.000000e+00 : f32
    %24 = vector.broadcast %cst_16 : f32 to vector<8x2xf32>
    %25 = arith.cmpf oge, %15, %24 : vector<8x2xf32>
    %26 = arith.mulf %19, %23 : vector<8x2xf32>
    %27 = arith.select %25, %23, %26 : vector<8x2xi1>, vector<8x2xf32>
    %c0_17 = arith.constant 0 : index
    %c0_18 = arith.constant 0 : index
    %28 = vector.load %arg6[%c0_17, %c0_18] : memref<8x2xf32, #tpu.memory_space<vmem>>, vector<8x2xf32>
    tpu.vector_store %arg6[%c0_17, %c0_18], %27 {strides = array<i32>} : memref<8x2xf32, #tpu.memory_space<vmem>>, vector<8x2xf32>,
    return
  }
  func.func @transform_0(%arg0: i32) -> (i32, i32) {
    %c0_i32 = arith.constant 0 : i32
    %c0_i32_0 = arith.constant 0 : i32
    return %arg0, %c0_i32 : i32, i32
  }
  func.func @transform_1(%arg0: i32) -> (i32, i32) {
    %c0_i32 = arith.constant 0 : i32
    %c0_i32_0 = arith.constant 0 : i32
    %c0_i32_1 = arith.constant 0 : i32
    return %c0_i32, %c0_i32_0 : i32, i32
  }
  func.func @transform_2(%arg0: i32) -> (i32, i32) {
    %c0_i32 = arith.constant 0 : i32
    %c0_i32_0 = arith.constant 0 : i32
    %c0_i32_1 = arith.constant 0 : i32
    return %c0_i32, %c0_i32_0 : i32, i32
  }
  func.func @transform_3(%arg0: i32) -> (i32, i32) {
    %c0_i32 = arith.constant 0 : i32
    %c0_i32_0 = arith.constant 0 : i32
    %c0_i32_1 = arith.constant 0 : i32
    return %c0_i32, %c0_i32_0 : i32, i32
  }
  func.func @transform_4(%arg0: i32) -> (i32, i32) {
    %c0_i32 = arith.constant 0 : i32
    %c0_i32_0 = arith.constant 0 : i32
    %c0_i32_1 = arith.constant 0 : i32
    return %c0_i32, %c0_i32_0 : i32, i32
  }
  func.func @transform_5(%arg0: i32) -> (i32, i32) {
    %c0_i32 = arith.constant 0 : i32
    %c0_i32_0 = arith.constant 0 : i32
    return %arg0, %c0_i32 : i32, i32
  }
  func.func @transform_6(%arg0: i32) -> (i32, i32) {
    %c0_i32 = arith.constant 0 : i32
    %c0_i32_0 = arith.constant 0 : i32
    return %arg0, %c0_i32 : i32, i32
  }
}

</mosaic_0001>

<llo_original>
// kernel: tpu_custom_call.1
$region0: #{tpu_custom_call.1}
  #allocation0 [shape = 'u32[]', space=smem, size = 0x4, offset = 0x4, fixed_abs, tag = 'smem constant byte address 0x4 - core index']
  #allocation1 [shape = 'u32[144,128]{1,0:T(1,128)}', space=vmem, size = 0x12000, scoped, tag = 'internal scratch']
  %s0 = inlined_call_operand.vmem [shape: f32[8,4], index: 0, kind: input, shape index: {}]
  %s1 = inlined_call_operand.vmem [shape: f32[4,32], index: 1, kind: input, shape index: {}]
  %s2 = inlined_call_operand.vmem [shape: f32[1,32], index: 2, kind: input, shape index: {}]
  %s3 = inlined_call_operand.vmem [shape: f32[32,3], index: 3, kind: input, shape index: {}]
  %s4 = inlined_call_operand.vmem [shape: f32[1,3], index: 4, kind: input, shape index: {}]
  %s5 = inlined_call_operand.vmem [shape: f32[8,2], index: 5, kind: output, shape index: {0}]
  %s6 = inlined_call_operand.vmem [shape: f32[8,1], index: 6, kind: output, shape index: {1}]
  %7 = xla_tuple %s5, %s6
  %s8 = sld [smem:[#allocation0]]
  $region38: #{tpu_custom_call.1} parent=0
    _
  %s10 = ssub.s32 1, %s8
  %s11 = scalar_select 0, %s10, %s8
  // Predicated region
  $region2: #{tpu_custom_call.1} parent=0 // pred_check
    _
  $region3: #{tpu_custom_call.1} parent=0 // pred_check_branch
    %13 = sbr.rel (0) target = $region5
  $region4: #{tpu_custom_call.1} parent=0 // pred_region
    _
  $region5: #{tpu_custom_call.1} parent=0 // pred_fallthru
    _
  // Predicated region
  $region6: #{tpu_custom_call.1} parent=0 // pred_check
    _
  $region7: #{tpu_custom_call.1} parent=0 // pred_check_branch
    %15 = sbr.rel (0) target = $region9
  $region8: #{tpu_custom_call.1} parent=0 // pred_region
    _
  $region9: #{tpu_custom_call.1} parent=0 // pred_fallthru
    _
  // Predicated region
  $region10: #{tpu_custom_call.1} parent=0 // pred_check
    _
  $region11: #{tpu_custom_call.1} parent=0 // pred_check_branch
    %17 = sbr.rel (0) target = $region13
  $region12: #{tpu_custom_call.1} parent=0 // pred_region
    _
  $region13: #{tpu_custom_call.1} parent=0 // pred_fallthru
    _
  // Predicated region
  $region14: #{tpu_custom_call.1} parent=0 // pred_check
    _
  $region15: #{tpu_custom_call.1} parent=0 // pred_check_branch
    %19 = sbr.rel (0) target = $region17
  $region16: #{tpu_custom_call.1} parent=0 // pred_region
    _
  $region17: #{tpu_custom_call.1} parent=0 // pred_fallthru
    _
  // Predicated region
  $region18: #{tpu_custom_call.1} parent=0 // pred_check
    _
  $region19: #{tpu_custom_call.1} parent=0 // pred_check_branch
    %21 = sbr.rel (0) target = $region21
  $region20: #{tpu_custom_call.1} parent=0 // pred_region
    _
  $region21: #{tpu_custom_call.1} parent=0 // pred_fallthru
    _
  %v22 = vld [vmem:[%s0] sm:$0xff]
  %v23 = vld [vmem:[%s1] sm:$0xf]
  %v24 = vld [vmem:[%s2] sm:$0x1]
  %v26 = vlaneseq
  %v27 = vshrl.u32 %v26, 7
  %v28 = vsub.s32 0, %v27
  %v29 = vrot.slane %v24, %v28
  %vm31 = vcmask 31744
  %v33 = vsel %vm31, %v22, 0
  %vm35 = vcmask 1043456
  %v37 = vsel %vm35, %v23, 0
  %39 = vmatprep.subr.mxu0 0.0
  %40 = vmatpush1.msra.mxu0 0.0
  %41 = vmatprep.subr.mxu0 0.0
  %42 = vmatpush1.msra.mxu0 0.0
  %43 = vmatprep.subr.mxu0 0.0
  %44 = vmatpush1.msra.mxu0 0.0
  %45 = vmatprep.subr.mxu0 0.0
  %46 = vmatpush1.msra.mxu0 0.0
  %47 = vmatprep.subr.mxu0 0.0
  %48 = vmatpush1.msra.mxu0 0.0
  %49 = vmatprep.subr.mxu0 0.0
  %50 = vmatpush1.msra.mxu0 0.0
  %51 = vmatprep.subr.mxu0 0.0
  %52 = vmatpush1.msra.mxu0 0.0
  %53 = vmatprep.subr.mxu0 0.0
  %54 = vmatpush1.msra.mxu0 0.0
  %55 = vmatprep.subr.mxu0 0.0
  %56 = vmatpush1.msra.mxu0 0.0
  %57 = vmatprep.subr.mxu0 0.0
  %58 = vmatpush1.msra.mxu0 0.0
  %59 = vmatprep.subr.mxu0 0.0
  %60 = vmatpush1.msra.mxu0 0.0
  %61 = vmatprep.subr.mxu0 0.0
  %62 = vmatpush1.msra.mxu0 0.0
  %63 = vmatprep.subr.mxu0 0.0
  %64 = vmatpush1.msra.mxu0 0.0
  %65 = vmatprep.subr.mxu0 0.0
  %66 = vmatpush1.msra.mxu0 0.0
  %67 = vmatprep.subr.mxu0 0.0
  %68 = vmatpush1.msra.mxu0 0.0
  %69 = vmatprep.subr.mxu0 0.0
  %70 = vmatpush1.msra.mxu0 %v37
  %71 = vmatprep.subr.mxu0 0.0
  %72 = vmatpush2.msra.mxu0 0.0
  %73 = vmatprep.subr.mxu0 0.0
  %74 = vmatpush2.msra.mxu0 0.0
  %75 = vmatprep.subr.mxu0 0.0
  %76 = vmatpush2.msra.mxu0 0.0
  %77 = vmatprep.subr.mxu0 0.0
  %78 = vmatpush2.msra.mxu0 0.0
  %79 = vmatprep.subr.mxu0 0.0
  %80 = vmatpush2.msra.mxu0 0.0
  %81 = vmatprep.subr.mxu0 0.0
  %82 = vmatpush2.msra.mxu0 0.0
  %83 = vmatprep.subr.mxu0 0.0
  %84 = vmatpush2.msra.mxu0 0.0
  %85 = vmatprep.subr.mxu0 0.0
  %86 = vmatpush2.msra.mxu0 0.0
  %87 = vmatprep.subr.mxu0 0.0
  %88 = vmatpush2.msra.mxu0 0.0
  %89 = vmatprep.subr.mxu0 0.0
  %90 = vmatpush2.msra.mxu0 0.0
  %91 = vmatprep.subr.mxu0 0.0
  %92 = vmatpush2.msra.mxu0 0.0
  %93 = vmatprep.subr.mxu0 0.0
  %94 = vmatpush2.msra.mxu0 0.0
  %95 = vmatprep.subr.mxu0 0.0
  %96 = vmatpush2.msra.mxu0 0.0
  %97 = vmatprep.subr.mxu0 0.0
  %98 = vmatpush2.msra.mxu0 0.0
  %99 = vmatprep.subr.mxu0 0.0
  %100 = vmatpush2.msra.mxu0 0.0
  %101 = vmatprep.subr.mxu0 0.0
  %102 = vmatpush2.msra.mxu0 0.0
  %103 = vmatprep.mubr.f32.mxu0 0.0
  %104 = vmatmul.mubr.f32.gmra.mxu0 %v33
  %v105 = vpop.f32.mrf.mxu0
  %v106 = vadd.f32 %v29, %v105
  %v107 = vpop.f32.mrf.mxu0
  %108 = vdwg.mxu0
  %v109 = vmax.f32 %v106, 0.0
  %v110 = vld [vmem:[%s3] sm:$0xff]
  %v111 = vld [vmem:[%s3 + $0x8] sm:$0xff]
  %v112 = vld [vmem:[%s3 + $0x10] sm:$0xff]
  %v113 = vld [vmem:[%s3 + $0x18] sm:$0xff]
  %v114 = vld [vmem:[%s4] sm:$0x1]
  %v116 = vlaneseq
  %v117 = vshrl.u32 %v116, 7
  %v118 = vsub.s32 0, %v117
  %v119 = vrot.slane %v114, %v118
  %vm121 = vcmask 261120
  %v123 = vsel %vm121, %v109, 0
  %125 = vmatprep.subr.mxu0 0.0
  %126 = vmatpush1.msra.mxu0 0.0
  %127 = vmatprep.subr.mxu0 0.0
  %128 = vmatpush1.msra.mxu0 0.0
  %129 = vmatprep.subr.mxu0 0.0
  %130 = vmatpush1.msra.mxu0 0.0
  %131 = vmatprep.subr.mxu0 0.0
  %132 = vmatpush1.msra.mxu0 0.0
  %133 = vmatprep.subr.mxu0 0.0
  %134 = vmatpush1.msra.mxu0 0.0
  %135 = vmatprep.subr.mxu0 0.0
  %136 = vmatpush1.msra.mxu0 0.0
  %137 = vmatprep.subr.mxu0 0.0
  %138 = vmatpush1.msra.mxu0 0.0
  %139 = vmatprep.subr.mxu0 0.0
  %140 = vmatpush1.msra.mxu0 0.0
  %141 = vmatprep.subr.mxu0 0.0
  %142 = vmatpush1.msra.mxu0 0.0
  %143 = vmatprep.subr.mxu0 0.0
  %144 = vmatpush1.msra.mxu0 0.0
  %145 = vmatprep.subr.mxu0 0.0
  %146 = vmatpush1.msra.mxu0 0.0
  %147 = vmatprep.subr.mxu0 0.0
  %148 = vmatpush1.msra.mxu0 0.0
  %149 = vmatprep.subr.mxu0 0.0
  %150 = vmatpush1.msra.mxu0 %v113
  %151 = vmatprep.subr.mxu0 0.0
  %152 = vmatpush1.msra.mxu0 %v112
  %153 = vmatprep.subr.mxu0 0.0
  %154 = vmatpush1.msra.mxu0 %v111
  %155 = vmatprep.subr.mxu0 0.0
  %156 = vmatpush1.msra.mxu0 %v110
  %157 = vmatprep.subr.mxu0 0.0
  %158 = vmatpush2.msra.mxu0 0.0
  %159 = vmatprep.subr.mxu0 0.0
  %160 = vmatpush2.msra.mxu0 0.0
  %161 = vmatprep.subr.mxu0 0.0
  %162 = vmatpush2.msra.mxu0 0.0
  %163 = vmatprep.subr.mxu0 0.0
  %164 = vmatpush2.msra.mxu0 0.0
  %165 = vmatprep.subr.mxu0 0.0
  %166 = vmatpush2.msra.mxu0 0.0
  %167 = vmatprep.subr.mxu0 0.0
  %168 = vmatpush2.msra.mxu0 0.0
  %169 = vmatprep.subr.mxu0 0.0
  %170 = vmatpush2.msra.mxu0 0.0
  %171 = vmatprep.subr.mxu0 0.0
  %172 = vmatpush2.msra.mxu0 0.0
  %173 = vmatprep.subr.mxu0 0.0
  %174 = vmatpush2.msra.mxu0 0.0
  %175 = vmatprep.subr.mxu0 0.0
  %176 = vmatpush2.msra.mxu0 0.0
  %177 = vmatprep.subr.mxu0 0.0
  %178 = vmatpush2.msra.mxu0 0.0
  %179 = vmatprep.subr.mxu0 0.0
  %180 = vmatpush2.msra.mxu0 0.0
  %181 = vmatprep.subr.mxu0 0.0
  %182 = vmatpush2.msra.mxu0 0.0
  %183 = vmatprep.subr.mxu0 0.0
  %184 = vmatpush2.msra.mxu0 0.0
  %185 = vmatprep.subr.mxu0 0.0
  %186 = vmatpush2.msra.mxu0 0.0
  %187 = vmatprep.subr.mxu0 0.0
  %188 = vmatpush2.msra.mxu0 0.0
  %189 = vmatprep.mubr.f32.mxu0 0.0
  %190 = vmatmul.mubr.f32.gmra.mxu0 %v123
  %v191 = vpop.f32.mrf.mxu0
  %v192 = vadd.f32 %v119, %v191
  %v193 = vpop.f32.mrf.mxu0
  %194 = vdwg.mxu0
  %196 = vrot.lane.b32.xlu0 %v192, 126
  %v197 = vpop.permute.xlu0 %196
  %vm199 = vcmask 7168
  %200 = vst.msk [vmem:[%s6] sm:$0xff] %vm199, %v197
  %v201 = vand.u32 2147483647, %v192
  %v202 = vsub.f32 0.0, %v201
  %v203 = vmul.f32 %v202, 1.442695
  %v204 = vpow.pop %v203
  %v205 = vadd.f32 %v204, 1.0
  %v206 = vrcp.pop %v205
  %v207 = vmul.f32 1.0, %v206
  %vm208 = vcmp.ge.f32.partialorder %v192, 0.0
  %v209 = vmul.f32 %v204, %v207
  %v210 = vsel %vm208, %v207, %v209
  %vm211 = vcmask 15360
  %212 = vst.msk [vmem:[%s5] sm:$0xff] %vm211, %v210
  // Predicated region
  $region22: #{tpu_custom_call.1} parent=0 // pred_check
    _
  $region23: #{tpu_custom_call.1} parent=0 // pred_check_branch
    %214 = sbr.rel (0) target = $region25
  $region24: #{tpu_custom_call.1} parent=0 // pred_region
    _
  $region25: #{tpu_custom_call.1} parent=0 // pred_fallthru
    _
  // Predicated region
  $region26: #{tpu_custom_call.1} parent=0 // pred_check
    _
  $region27: #{tpu_custom_call.1} parent=0 // pred_check_branch
    %216 = sbr.rel (0) target = $region29
  $region28: #{tpu_custom_call.1} parent=0 // pred_region
    _
  $region29: #{tpu_custom_call.1} parent=0 // pred_fallthru
    _
  // Predicated region
  $region30: #{tpu_custom_call.1} parent=0 // pred_check
    _
  $region31: #{tpu_custom_call.1} parent=0 // pred_check_branch
    %218 = sbr.rel (0) target = $region33
  $region32: #{tpu_custom_call.1} parent=0 // pred_region
    _
  $region33: #{tpu_custom_call.1} parent=0 // pred_fallthru
    _
  // Predicated region
  $region34: #{tpu_custom_call.1} parent=0 // pred_check
    _
  $region35: #{tpu_custom_call.1} parent=0 // pred_check_branch
    %220 = sbr.rel (0) target = $region37
  $region36: #{tpu_custom_call.1} parent=0 // pred_region
    _
  $region37: #{tpu_custom_call.1} parent=0 // pred_fallthru
    _

</llo_original>
